<compile_context>
chip_gen: v7x
topology: tpu7x:2x2x1
jax: 0.10.0
libtpu: 0.0.40
codegen_flags: <defaults>
</compile_context>

<pallas_src>
import functools

import jax
import jax.numpy as jnp
from jax.experimental import pallas as pl
from jax.experimental.pallas import tpu as pltpu


def _round_up(x: int, m: int) -> int:
    return ((x + m - 1) // m) * m


def _choose_tm(m: int, tm_max: int):
    """Pick a token-axis tile. Returns (tm, m_padded).

    Preferences: (1) no row padding (tm divides M); (2) >= 2 grid steps once
    M >= 512 so v7x megacore can shard the 'parallel' token axis across both
    TensorCores; (3) tm a multiple of 8 (sublane) unless tm == M exactly.
    """
    want_multi = m >= 512
    upper = min(tm_max, m)
    t = (upper // 8) * 8
    while t >= 8:
        if m % t == 0 and (not want_multi or m // t >= 2):
            return t, m
        t -= 8
    if m <= tm_max and not want_multi:
        return m, m                       # single full-M tile (block == full dim)
    # Fall back to padding the token axis (padded rows sliced off after).
    if want_multi:
        nsteps = max(2, -(-m // tm_max))
        tm = _round_up(-(-m // nsteps), 8)
    else:
        tm = min(tm_max, _round_up(m, 8))
    return tm, _round_up(m, tm)


def _fused_mlp_kernel(x_ref, *refs, num_layers: int, apply_relu: bool):
    """refs = (w_0, b_0, w_1, b_1, ..., w_{L-1}, b_{L-1}, o_ref).

    x_ref : (tm, Din)      f32  (cast to bf16 in-kernel; free under the MXU)
    w_i   : (Ki, Ni)       bf16 (y = x @ w + b layout; hidden dims padded to
                                 128, first K and last N left unpadded)
    b_i   : (1, Ni)        f32
    o_ref : (tm, dim_out)  f32
    """
    o_ref = refs[-1]
    h = x_ref[...].astype(jnp.bfloat16)
    for li in range(num_layers):
        w_ref = refs[2 * li]
        b_ref = refs[2 * li + 1]
        acc = jnp.dot(h, w_ref[...],
                      preferred_element_type=jnp.float32)   # MXU, f32 acc
        acc = acc + b_ref[...]                               # f32 epilogue (VPU)
        if apply_relu:
            acc = jnp.maximum(acc, 0.0)
        if li < num_layers - 1:
            h = acc.astype(jnp.bfloat16)       # bf16 operand for next MXU pass
        else:
            h = acc
    o_ref[...] = h.astype(o_ref.dtype)


def _projection_forward(x, weights, biases, *, non_linearity: bool,
                        dim_out: int, tm_max: int = 512):
    """x: [B, S, Din] f32; weights[i]: (Ki, Ni) bf16; biases[i]: (1, Ni) f32.
    Returns [B, S, dim_out] f32."""
    B, S, Din = x.shape
    M = B * S
    num_layers = len(weights)

    # Flatten tokens only; the bf16 cast happens inside the kernel, and the
    # feature dim stays unpadded (first weight keeps K = Din).
    x2 = x.reshape(M, Din)
    tm, Mp = _choose_tm(M, tm_max)
    if Mp > M:
        x2 = jnp.pad(x2, ((0, Mp - M), (0, 0)))

    in_specs = [pl.BlockSpec((tm, Din), lambda i: (i, 0))]
    operands = [x2]
    for w, b in zip(weights, biases):
        k, n = w.shape
        # Grid-invariant (constant index_map) + single buffer -> VMEM-resident
        # with no wasted second pipeline buffer.
        in_specs.append(pl.BlockSpec((k, n), lambda i: (0, 0),
                                     pipeline_mode=pl.Buffered(1)))
        in_specs.append(pl.BlockSpec((1, n), lambda i: (0, 0),
                                     pipeline_mode=pl.Buffered(1)))
        operands.append(w)
        operands.append(b)

    # VMEM budget: resident weights/biases (single-buffered) + double-buffered
    # x/out tiles + largest live (f32 acc + bf16 h) intermediate, w/ headroom.
    resident = (sum(int(w.size) * w.dtype.itemsize for w in weights)
                + sum(int(b.size) * b.dtype.itemsize for b in biases))
    stream = 2 * tm * Din * x.dtype.itemsize + 2 * tm * dim_out * 4
    interm = max(tm * w.shape[1] * 4 + tm * w.shape[0] * 2 for w in weights)
    need = resident + stream + interm
    try:
        phys = int(pltpu.get_tpu_info().vmem_capacity_bytes)
    except Exception:
        phys = 64 * 1024 * 1024              # conservative (v7x per-TC)
    vmem_limit = int(min(max(need * 1.25, 32 * 1024 * 1024),
                         phys - 2 * 1024 * 1024))

    flops = 2 * Mp * sum(w.shape[0] * w.shape[1] for w in weights)
    bytes_accessed = int(x2.size) * x2.dtype.itemsize + Mp * dim_out * 4 + resident

    out = pl.pallas_call(
        functools.partial(_fused_mlp_kernel,
                          num_layers=num_layers,
                          apply_relu=non_linearity),
        out_shape=jax.ShapeDtypeStruct((Mp, dim_out), jnp.float32),
        grid=(Mp // tm,),
        in_specs=in_specs,
        out_specs=pl.BlockSpec((tm, dim_out), lambda i: (i, 0)),
        compiler_params=pltpu.CompilerParams(
            dimension_semantics=("parallel",),
            vmem_limit_bytes=vmem_limit),
        cost_estimate=pl.CostEstimate(flops=flops, transcendentals=0,
                                      bytes_accessed=bytes_accessed),
    )(*operands)

    if Mp > M:                               # only when no exact tile existed
        out = out[:M]
    return out.reshape(B, S, dim_out)


class ProjectionLayerPallas:
    """Mirrors ProjectionLayer: Linear(dim_list[i] -> dim_list[i+1]) chain,
    optional ReLU after each Linear (including the last, as the spec's
    __init__ literally does)."""

    def __init__(self, dim_list, non_linearity=False, key=None, tm_max=512):
        # tm_max: 512 is a safe default everywhere; on v6e (128 MiB VMEM,
        # single TC) it can be raised toward 1024 for better streaming.
        if key is None:
            key = jax.random.PRNGKey(0)
        self.dim_input = dim_list[0]
        self.dim_h = dim_list[-1]
        self.non_linearity = non_linearity

        n_lin = len(dim_list) - 1
        self.ref_params = []   # unpadded f32 (w (Din,Dout), b (Dout,)) for checks
        weights, biases = [], []
        prev_out_dim = dim_list[0]
        for i in range(n_lin):
            fan_in, fan_out = dim_list[i], dim_list[i + 1]
            key, kw, kb = jax.random.split(key, 3)
            bound = 1.0 / (fan_in ** 0.5)       # torch.nn.Linear default init
            w = jax.random.uniform(kw, (fan_in, fan_out), jnp.float32,
                                   -bound, bound)   # stored as W^T of torch
            b = jax.random.uniform(kb, (fan_out,), jnp.float32, -bound, bound)
            self.ref_params.append((w, b))

            # First layer keeps K = fan_in unpadded (x is fed unpadded); last
            # layer keeps N = dim_h unpadded (no post-kernel feature slice);
            # hidden dims are padded to 128 for full-lane MXU tiles.
            din_p = fan_in if i == 0 else prev_out_dim
            dout_p = fan_out if i == n_lin - 1 else _round_up(fan_out, 128)
            w_p = jnp.zeros((din_p, dout_p), jnp.float32).at[:fan_in, :fan_out].set(w)
            b_p = jnp.zeros((1, dout_p), jnp.float32).at[0, :fan_out].set(b)
            weights.append(w_p.astype(jnp.bfloat16))   # MXU operand dtype
            biases.append(b_p)                         # f32 epilogue
            prev_out_dim = dout_p

        self.weights = tuple(weights)
        self.biases = tuple(biases)
        # Hoist pallas_call construction behind jit (cached per input shape).
        self._apply = jax.jit(functools.partial(
            _projection_forward,
            non_linearity=self.non_linearity,
            dim_out=self.dim_h,
            tm_max=tm_max))

    def __call__(self, x):
        # x: [batch, seq, dim_input] -> [batch, seq, dim_h]
        return self._apply(x, self.weights, self.biases)


def _reference_forward(x, ref_params, non_linearity):
    """Plain-JAX reference with the same bf16-operand / f32-accumulate math."""
    B, S, Din = x.shape
    h = x.reshape(B * S, Din)
    for (w, b) in ref_params:
        h = jnp.dot(h.astype(jnp.bfloat16), w.astype(jnp.bfloat16),
                    preferred_element_type=jnp.float32) + b
        if non_linearity:
            h = jnp.maximum(h, 0.0)
    return h.reshape(B, S, -1)


if __name__ == "__main__":
    key = jax.random.PRNGKey(0)
    k_x, k_p = jax.random.split(key)

    batch, seq = 2, 8
    dim_list = [32, 64, 16]  # dim_input=32 -> hidden 64 -> dim_h=16

    x = jax.random.normal(k_x, (batch, seq, dim_list[0]), jnp.float32)

    ok = True
    for non_lin in (False, True):
        model = ProjectionLayerPallas(dim_list, non_linearity=non_lin, key=k_p)
        out = jax.block_until_ready(model(x))
        ref = _reference_forward(x, model.ref_params, non_lin)

        assert out.shape == (batch, seq, dim_list[-1])
        ok = ok and bool(jnp.allclose(out, ref, atol=1e-2, rtol=1e-2))

    if ok:
        print("KERNEL_OK")
    else:
        print("KERNEL_MISMATCH")
</pallas_src>

<mosaic_0001>
module attributes {stable_mosaic.version = 11 : i64} {
  func.func @_fused_mlp_kernel(%arg0: i32, %arg1: memref<16x32xf32, #tpu.memory_space<vmem>>, %arg2: memref<32x128xbf16, #tpu.memory_space<vmem>>, %arg3: memref<1x128xf32, #tpu.memory_space<vmem>>, %arg4: memref<128x16xbf16, #tpu.memory_space<vmem>>, %arg5: memref<1x16xf32, #tpu.memory_space<vmem>>, %arg6: memref<16x16xf32, #tpu.memory_space<vmem>>) attributes {dimension_semantics = [#tpu.dimension_semantics<parallel>], iteration_bounds = array<i64: 1>, scalar_prefetch = 0 : i64, scratch_operands = 0 : i64, tpu.core_type = #tpu.core_type<tc>, window_params = [{transform_indices = @transform_0, window_bounds = array<i64: 16, 32>}, {pipeline_mode = #tpu.pipeline_mode<synchronous>, transform_indices = @transform_1, window_bounds = array<i64: 32, 128>}, {pipeline_mode = #tpu.pipeline_mode<synchronous>, transform_indices = @transform_2, window_bounds = array<i64: 1, 128>}, {pipeline_mode = #tpu.pipeline_mode<synchronous>, transform_indices = @transform_3, window_bounds = array<i64: 128, 16>}, {pipeline_mode = #tpu.pipeline_mode<synchronous>, transform_indices = @transform_4, window_bounds = array<i64: 1, 16>}, {transform_indices = @transform_5, window_bounds = array<i64: 16, 16>}]} {
    %c0 = arith.constant 0 : index
    %c0_0 = arith.constant 0 : index
    %0 = vector.load %arg1[%c0, %c0_0] : memref<16x32xf32, #tpu.memory_space<vmem>>, vector<16x32xf32>
    %1 = arith.truncf %0 : vector<16x32xf32> to vector<16x32xbf16>
    %c0_1 = arith.constant 0 : index
    %c0_2 = arith.constant 0 : index
    %2 = vector.load %arg2[%c0_1, %c0_2] : memref<32x128xbf16, #tpu.memory_space<vmem>>, vector<32x128xbf16>
    %cst = arith.constant dense<0.000000e+00> : vector<16x128xf32>
    %3 = tpu.matmul %1, %2, %cst {dimension_numbers = #tpu.dot_dimension_numbers<[1], [0], [0], [1], [0, 0, 1, 1], [], []>} : vector<16x32xbf16>, vector<32x128xbf16>, vector<16x128xf32> -> vector<16x128xf32>
    %c0_3 = arith.constant 0 : index
    %c0_4 = arith.constant 0 : index
    %4 = vector.load %arg3[%c0_3, %c0_4] : memref<1x128xf32, #tpu.memory_space<vmem>>, vector<1x128xf32>
    %5 = vector.broadcast %4 : vector<1x128xf32> to vector<16x128xf32>
    %6 = arith.addf %3, %5 : vector<16x128xf32>
    %7 = arith.truncf %6 : vector<16x128xf32> to vector<16x128xbf16>
    %c0_5 = arith.constant 0 : index
    %c0_6 = arith.constant 0 : index
    %8 = vector.load %arg4[%c0_5, %c0_6] : memref<128x16xbf16, #tpu.memory_space<vmem>>, vector<128x16xbf16>
    %cst_7 = arith.constant dense<0.000000e+00> : vector<16x16xf32>
    %9 = tpu.matmul %7, %8, %cst_7 {dimension_numbers = #tpu.dot_dimension_numbers<[1], [0], [0], [1], [0, 0, 1, 1], [], []>} : vector<16x128xbf16>, vector<128x16xbf16>, vector<16x16xf32> -> vector<16x16xf32>
    %c0_8 = arith.constant 0 : index
    %c0_9 = arith.constant 0 : index
    %10 = vector.load %arg5[%c0_8, %c0_9] : memref<1x16xf32, #tpu.memory_space<vmem>>, vector<1x16xf32>
    %11 = vector.broadcast %10 : vector<1x16xf32> to vector<16x16xf32>
    %12 = arith.addf %9, %11 : vector<16x16xf32>
    %c0_10 = arith.constant 0 : index
    %c0_11 = arith.constant 0 : index
    %13 = vector.load %arg6[%c0_10, %c0_11] : memref<16x16xf32, #tpu.memory_space<vmem>>, vector<16x16xf32>
    tpu.vector_store %arg6[%c0_10, %c0_11], %12 {strides = array<i32>} : memref<16x16xf32, #tpu.memory_space<vmem>>, vector<16x16xf32>,
    return
  }
  func.func @transform_0(%arg0: i32) -> (i32, i32) {
    %c0_i32 = arith.constant 0 : i32
    %c0_i32_0 = arith.constant 0 : i32
    return %arg0, %c0_i32 : i32, i32
  }
  func.func @transform_1(%arg0: i32) -> (i32, i32) {
    %c0_i32 = arith.constant 0 : i32
    %c0_i32_0 = arith.constant 0 : i32
    %c0_i32_1 = arith.constant 0 : i32
    return %c0_i32, %c0_i32_0 : i32, i32
  }
  func.func @transform_2(%arg0: i32) -> (i32, i32) {
    %c0_i32 = arith.constant 0 : i32
    %c0_i32_0 = arith.constant 0 : i32
    %c0_i32_1 = arith.constant 0 : i32
    return %c0_i32, %c0_i32_0 : i32, i32
  }
  func.func @transform_3(%arg0: i32) -> (i32, i32) {
    %c0_i32 = arith.constant 0 : i32
    %c0_i32_0 = arith.constant 0 : i32
    %c0_i32_1 = arith.constant 0 : i32
    return %c0_i32, %c0_i32_0 : i32, i32
  }
  func.func @transform_4(%arg0: i32) -> (i32, i32) {
    %c0_i32 = arith.constant 0 : i32
    %c0_i32_0 = arith.constant 0 : i32
    %c0_i32_1 = arith.constant 0 : i32
    return %c0_i32, %c0_i32_0 : i32, i32
  }
  func.func @transform_5(%arg0: i32) -> (i32, i32) {
    %c0_i32 = arith.constant 0 : i32
    %c0_i32_0 = arith.constant 0 : i32
    return %arg0, %c0_i32 : i32, i32
  }
}

</mosaic_0001>

<llo_original>
// kernel: _projection_forward.1
$region0: #{_projection_forward.1}
  #allocation0 [shape = 'u32[]', space=smem, size = 0x4, offset = 0x4, fixed_abs, tag = 'smem constant byte address 0x4 - core index']
  #allocation1 [shape = 'u32[144,128]{1,0:T(1,128)}', space=vmem, size = 0x12000, scoped, tag = 'internal scratch']
  %s0 = inlined_call_operand.vmem [shape: f32[16,32], index: 0, kind: input, shape index: {}]
  %s1 = inlined_call_operand.vmem [shape: bf16[32,128], index: 1, kind: input, shape index: {}]
  %s2 = inlined_call_operand.vmem [shape: f32[1,128], index: 2, kind: input, shape index: {}]
  %s3 = inlined_call_operand.vmem [shape: bf16[128,16], index: 3, kind: input, shape index: {}]
  %s4 = inlined_call_operand.vmem [shape: f32[1,16], index: 4, kind: input, shape index: {}]
  %s5 = inlined_call_operand.hbm [shape: f32[16,16], index: 5, kind: output, shape index: {}]
  %s6 = sld [smem:[#allocation0]]
  $region30: #{_projection_forward.1} parent=0
    _
  %s8 = ssub.s32 1, %s6
  %s9 = scalar_select 0, %s8, %s6
  $region1: #{_projection_forward.1} parent=0
    #allocation2 [shape = 'u8[8192]{0}', space=vmem, size = 0x2000, scoped, tag = 'output window, operand 0, single buffered']
    #allocation3 [shape = 's32[1]{0}', space=sflag, size = 0x4, scoped, tag = 'scoped memory for _projection_forward.1']
    %10 = vsyncpa [#allocation3], 0
    // Predicated region
    $region2: #{_projection_forward.1} parent=1 // pred_check
      _
    $region3: #{_projection_forward.1} parent=1 // pred_check_branch
      %12 = sbr.rel (0) target = $region5
    $region4: #{_projection_forward.1} parent=1 // pred_region
      _
    $region5: #{_projection_forward.1} parent=1 // pred_fallthru
      _
    // Predicated region
    $region6: #{_projection_forward.1} parent=1 // pred_check
      _
    $region7: #{_projection_forward.1} parent=1 // pred_check_branch
      %14 = sbr.rel (0) target = $region9
    $region8: #{_projection_forward.1} parent=1 // pred_region
      _
    $region9: #{_projection_forward.1} parent=1 // pred_fallthru
      _
    // Predicated region
    $region10: #{_projection_forward.1} parent=1 // pred_check
      _
    $region11: #{_projection_forward.1} parent=1 // pred_check_branch
      %16 = sbr.rel (0) target = $region13
    $region12: #{_projection_forward.1} parent=1 // pred_region
      _
    $region13: #{_projection_forward.1} parent=1 // pred_fallthru
      _
    // Predicated region
    $region14: #{_projection_forward.1} parent=1 // pred_check
      _
    $region15: #{_projection_forward.1} parent=1 // pred_check_branch
      %18 = sbr.rel (0) target = $region17
    $region16: #{_projection_forward.1} parent=1 // pred_region
      _
    $region17: #{_projection_forward.1} parent=1 // pred_fallthru
      _
    // Predicated region
    $region18: #{_projection_forward.1} parent=1 // pred_check
      _
    $region19: #{_projection_forward.1} parent=1 // pred_check_branch
      %20 = sbr.rel (0) target = $region21
    $region20: #{_projection_forward.1} parent=1 // pred_region
      _
    $region21: #{_projection_forward.1} parent=1 // pred_fallthru
      _
    %v22 = vld [vmem:[%s0] sm:$0xff]
    %v23 = vld [vmem:[%s0 + $0x8] sm:$0xff]
    %v24 = vpack.c.bf16 %v23, %v22
    %v25 = vld [vmem:[%s1] sm:$0xf]
    %v26 = vld [vmem:[%s1 + $0x4] sm:$0xf]
    %v27 = vld [vmem:[%s1 + $0x8] sm:$0xf]
    %v28 = vld [vmem:[%s1 + $0xc] sm:$0xf]
    %v29 = vld [vmem:[%s2] sm:$0x1]
    %v31 = vlaneseq
    %v32 = vshrl.u32 %v31, 7
    %v33 = vsub.s32 0, %v32
    %v34 = vrot.slane %v29, %v33
    %v40 = vunpack.c.l.b16 %v25
    %v41 = vunpack.c.l.b16 %v26
    %v42 = vunpack.c.l.b16 %v27
    %v43 = vunpack.c.l.b16 %v28
    %v44 = vpack.c.b16 %v41, %v40
    %v45 = vpack.c.b16 %v43, %v42
    %vm48 = vcmask 261120
    %v50 = vsel %vm48, %v24, 0
    %52 = vmatprep.subr.bf16.mxu0 0
    %53 = vmatpush1.bf16.msra.mxu0 %v44
    %54 = vmatprep.subr.bf16.mxu0 0
    %55 = vmatpush1.bf16.msra.mxu0 %v45
    %56 = vmatprep.subr.bf16.mxu0 0
    %57 = vmatpush1.bf16.msra.mxu0 0
    %58 = vmatprep.subr.bf16.mxu0 0
    %59 = vmatpush1.bf16.msra.mxu0 0
    %60 = vmatprep.subr.bf16.mxu0 0
    %61 = vmatpush1.bf16.msra.mxu0 0
    %62 = vmatprep.subr.bf16.mxu0 0
    %63 = vmatpush1.bf16.msra.mxu0 0
    %64 = vmatprep.subr.bf16.mxu0 0
    %65 = vmatpush1.bf16.msra.mxu0 0
    %66 = vmatprep.subr.bf16.mxu0 0
    %67 = vmatpush1.bf16.msra.mxu0 0
    %68 = vmatprep.subr.bf16.mxu0 0
    %69 = vmatpush1.bf16.msra.mxu0 0
    %70 = vmatprep.subr.bf16.mxu0 0
    %71 = vmatpush1.bf16.msra.mxu0 0
    %72 = vmatprep.subr.bf16.mxu0 0
    %73 = vmatpush1.bf16.msra.mxu0 0
    %74 = vmatprep.subr.bf16.mxu0 0
    %75 = vmatpush1.bf16.msra.mxu0 0
    %76 = vmatprep.subr.bf16.mxu0 0
    %77 = vmatpush1.bf16.msra.mxu0 0
    %78 = vmatprep.subr.bf16.mxu0 0
    %79 = vmatpush1.bf16.msra.mxu0 0
    %80 = vmatprep.subr.bf16.mxu0 0
    %81 = vmatpush1.bf16.msra.mxu0 0
    %82 = vmatprep.subr.bf16.mxu0 0
    %83 = vmatpush1.bf16.msra.mxu0 0
    %84 = vmatprep.mubr.bf16.mxu0 0
    %85 = vmatmul.mubr.bf16.gmra.mrb[0].mxu0 %v50
    %v86 = vpop.f32.mrb[0].mxu0
    %v87 = vadd.f32 %v34, %v86
    %v88 = vpop.f32.mrb[0].mxu0
    %v89 = vpop.f32.mrb[0].mxu0
    %v90 = vadd.f32 %v34, %v89
    %v91 = vpop.f32.mrb[0].mxu0
    %92 = vdwg.mxu0
    %v93 = vpack.c.bf16 %v90, %v87
    %v94 = vld [vmem:[%s3] sm:$0xf]
    %v95 = vld [vmem:[%s3 + $0x4] sm:$0xf]
    %v96 = vld [vmem:[%s3 + $0x8] sm:$0xf]
    %v97 = vld [vmem:[%s3 + $0xc] sm:$0xf]
    %v98 = vld [vmem:[%s3 + $0x10] sm:$0xf]
    %v99 = vld [vmem:[%s3 + $0x14] sm:$0xf]
    %v100 = vld [vmem:[%s3 + $0x18] sm:$0xf]
    %v101 = vld [vmem:[%s3 + $0x1c] sm:$0xf]
    %v102 = vld [vmem:[%s3 + $0x20] sm:$0xf]
    %v103 = vld [vmem:[%s3 + $0x24] sm:$0xf]
    %v104 = vld [vmem:[%s3 + $0x28] sm:$0xf]
    %v105 = vld [vmem:[%s3 + $0x2c] sm:$0xf]
    %v106 = vld [vmem:[%s3 + $0x30] sm:$0xf]
    %v107 = vld [vmem:[%s3 + $0x34] sm:$0xf]
    %v108 = vld [vmem:[%s3 + $0x38] sm:$0xf]
    %v109 = vld [vmem:[%s3 + $0x3c] sm:$0xf]
    %v110 = vld [vmem:[%s4] sm:$0x1]
    %v112 = vlaneseq
    %v113 = vshrl.u32 %v112, 7
    %v114 = vsub.s32 0, %v113
    %v115 = vrot.slane %v110, %v114
    %v133 = vunpack.c.l.b16 %v94
    %v134 = vunpack.c.l.b16 %v95
    %v135 = vunpack.c.l.b16 %v96
    %v136 = vunpack.c.l.b16 %v97
    %v137 = vunpack.c.l.b16 %v98
    %v138 = vunpack.c.l.b16 %v99
    %v139 = vunpack.c.l.b16 %v100
    %v140 = vunpack.c.l.b16 %v101
    %v141 = vunpack.c.l.b16 %v102
    %v142 = vunpack.c.l.b16 %v103
    %v143 = vunpack.c.l.b16 %v104
    %v144 = vunpack.c.l.b16 %v105
    %v145 = vunpack.c.l.b16 %v106
    %v146 = vunpack.c.l.b16 %v107
    %v147 = vunpack.c.l.b16 %v108
    %v148 = vunpack.c.l.b16 %v109
    %v149 = vpack.c.b16 %v134, %v133
    %v150 = vpack.c.b16 %v136, %v135
    %v151 = vpack.c.b16 %v138, %v137
    %v152 = vpack.c.b16 %v140, %v139
    %v153 = vpack.c.b16 %v142, %v141
    %v154 = vpack.c.b16 %v144, %v143
    %v155 = vpack.c.b16 %v146, %v145
    %v156 = vpack.c.b16 %v148, %v147
    %165 = vmatprep.subr.bf16.mxu0 0
    %166 = vmatpush1.bf16.msra.mxu0 %v149
    %167 = vmatprep.subr.bf16.mxu0 0
    %168 = vmatpush1.bf16.msra.mxu0 %v150
    %169 = vmatprep.subr.bf16.mxu0 0
    %170 = vmatpush1.bf16.msra.mxu0 %v151
    %171 = vmatprep.subr.bf16.mxu0 0
    %172 = vmatpush1.bf16.msra.mxu0 %v152
    %173 = vmatprep.subr.bf16.mxu0 0
    %174 = vmatpush1.bf16.msra.mxu0 %v153
    %175 = vmatprep.subr.bf16.mxu0 0
    %176 = vmatpush1.bf16.msra.mxu0 %v154
    %177 = vmatprep.subr.bf16.mxu0 0
    %178 = vmatpush1.bf16.msra.mxu0 %v155
    %179 = vmatprep.subr.bf16.mxu0 0
    %180 = vmatpush1.bf16.msra.mxu0 %v156
    %181 = vmatprep.subr.bf16.mxu0 0
    %182 = vmatpush1.bf16.msra.mxu0 0
    %183 = vmatprep.subr.bf16.mxu0 0
    %184 = vmatpush1.bf16.msra.mxu0 0
    %185 = vmatprep.subr.bf16.mxu0 0
    %186 = vmatpush1.bf16.msra.mxu0 0
    %187 = vmatprep.subr.bf16.mxu0 0
    %188 = vmatpush1.bf16.msra.mxu0 0
    %189 = vmatprep.subr.bf16.mxu0 0
    %190 = vmatpush1.bf16.msra.mxu0 0
    %191 = vmatprep.subr.bf16.mxu0 0
    %192 = vmatpush1.bf16.msra.mxu0 0
    %193 = vmatprep.subr.bf16.mxu0 0
    %194 = vmatpush1.bf16.msra.mxu0 0
    %195 = vmatprep.subr.bf16.mxu0 0
    %196 = vmatpush1.bf16.msra.mxu0 0
    %197 = vmatprep.mubr.bf16.mxu0 0
    %198 = vmatmul.mubr.bf16.gmra.mrb[0].mxu0 %v93
    %v199 = vpop.f32.mrb[0].mxu0
    %v200 = vadd.f32 %v115, %v199
    %v201 = vpop.f32.mrb[0].mxu0
    %v202 = vpop.f32.mrb[0].mxu0
    %v203 = vadd.f32 %v115, %v202
    %v204 = vpop.f32.mrb[0].mxu0
    %205 = vdwg.mxu0
    %vm206 = vcmask 130048
    %207 = vst.msk [vmem:[#allocation2] sm:$0xff] %vm206, %v200
    %208 = vst.msk [vmem:[#allocation2 + $0x8] sm:$0xff] %vm206, %v203
    // Predicated region
    $region22: #{_projection_forward.1} parent=1 // pred_check
      _
    $region23: #{_projection_forward.1} parent=1 // pred_check_branch
      %210 = sbr.rel (0) target = $region25
    $region24: #{_projection_forward.1} parent=1 // pred_region
      %s212 = ssub.s32 256, 256
      %213 = vsyncadd [#allocation3], %s212
      %s214 = sshll.u32 [#allocation2], 4
      %s215 = int_to_ptr.vmem [resolvable:$true] %s214
      %220 = dma.vmem_to_hbm [thread:$0]  %s215, 256, %s5, [#allocation3], 128, 128, 8
    $region25: #{_projection_forward.1} parent=1 // pred_fallthru
      _
    // Predicated region
    $region26: #{_projection_forward.1} parent=1 // pred_check
      _
    $region27: #{_projection_forward.1} parent=1 // pred_check_branch
      %222 = sbr.rel (0) target = $region29
    $region28: #{_projection_forward.1} parent=1 // pred_region
      %223 = dma.done [#allocation3], 256
    $region29: #{_projection_forward.1} parent=1 // pred_fallthru
      _
    %224 = vsyncpa [#allocation3], 1

</llo_original>
